<compile_context>
chip_gen: v7x
topology: tpu7x:2x2x1
jax: 0.10.0
libtpu: 0.0.40
codegen_flags: <defaults>
</compile_context>

<pallas_src>
import jax
import jax.numpy as jnp
from jax.experimental import pallas as pl
from jax.experimental.pallas import tpu as pltpu

_LANE = 128                  # TPU lane width
_MAX_TB = 16 * 1024          # max batch-tile rows; (TB,10) f32 pads to TB*512 B in VMEM
_SINGLE_TILE_MAX = 8 * 1024  # below this, run the whole batch as one exact block


def _round_up(n, m):
    return ((n + m - 1) // m) * m


def _pick_batch_tile(batch):
    """Batch-tile size (static Python int)."""
    if batch <= _SINGLE_TILE_MAX:
        # One block equal to the full array: no (8,128) divisibility constraint
        # applies and there is no per-step overhead to amortize.
        return batch
    # Multi-block: tile must be a multiple of 128 so the (1, TB) output block
    # stays lane-dense; aim for >= 2 steps so v7x megacore has work on both TCs.
    tb = min(_MAX_TB, _round_up(-(-batch // 2), _LANE))
    n = -(-batch // tb)
    if n > 2 and n % 2 == 1:
        # Cheap rebalance: make the step count even for the two v7x TCs.
        tb = min(_MAX_TB, _round_up(-(-batch // (n + 1)), _LANE))
    return tb


def _collapsed_linear_kernel(x_ref, wt_ref, b_ref, o_ref):
    # x_ref : (TB, 10)  batch rows on sublanes, features on lanes (natural layout)
    # wt_ref: (1, 10)   collapsed weight row (VMEM-resident, constant index map)
    # b_ref : (1, 1)    collapsed bias
    # o_ref : (1, TB)   lane-dense output row (unmasked stores)
    #
    # "NT" contraction: wt's dim 1 against x's dim 1, so the batch lands on the
    # lane axis of the result with no explicit transpose of the big tile.
    o_ref[...] = jax.lax.dot_general(
        wt_ref[...], x_ref[...],
        dimension_numbers=(((1,), (1,)), ((), ())),
        preferred_element_type=jnp.float32,
    ) + b_ref[...]


@jax.jit
def model_with_nesting_forward(x, params):
    """x: (B, 10) float32 -> (B, 1) float32."""
    w1, b1, w2, b2, w3, b3 = (
        params["w1"], params["b1"], params["w2"],
        params["b2"], params["w3"], params["b3"],
    )

    # Fold the activation-free 3-layer MLP into a single Linear(10, 1).
    w = w1 @ w2 @ w3                          # (10, 1)
    b = b1 @ w2 @ w3 + b2 @ w3 + b3           # (1, 1)
    wt = w.T                                  # (1, 10)

    batch, in_feat = x.shape
    tb = _pick_batch_tile(batch)
    n_tiles = pl.cdiv(batch, tb)

    cost = pl.CostEstimate(
        flops=2 * batch * in_feat,
        transcendentals=0,
        bytes_accessed=4 * batch * in_feat + 4 * batch + 4 * (in_feat + 1),
    )

    # NOTE: wt / b could be moved to SMEM via scalar prefetch (saves a few KiB
    # of double-buffered VMEM); kept as constant-index VMEM blocks since the
    # MXU consumes them as a VMEM tile anyway (review: minor, do-last item).
    out_row = pl.pallas_call(
        _collapsed_linear_kernel,
        out_shape=jax.ShapeDtypeStruct((1, batch), jnp.float32),
        grid=(n_tiles,),
        in_specs=[
            pl.BlockSpec((tb, in_feat), lambda i: (i, 0)),   # x tile (pipelined)
            pl.BlockSpec((1, in_feat), lambda i: (0, 0)),    # weight, resident
            pl.BlockSpec((1, 1), lambda i: (0, 0)),          # bias, resident
        ],
        out_specs=pl.BlockSpec((1, tb), lambda i: (0, i)),
        compiler_params=pltpu.CompilerParams(
            dimension_semantics=("parallel",),               # both TCs on v7x
            vmem_limit_bytes=32 * 1024 * 1024,
        ),
        cost_estimate=cost,
    )(x, wt, b)

    return out_row.reshape(batch, 1)                         # (B, 1), tiny relayout


def init_params(key):
    """Deterministic parameter init mimicking PyTorch Linear shapes.

    PyTorch stores Linear weight as (out, in); we keep the transposed (in, out)
    form since that is what the math consumes.  Biases kept 2-D (1, out).
    """
    k1, k2, k3, k4, k5, k6 = jax.random.split(key, 6)

    def uniform(k, shape, fan_in):
        bound = 1.0 / jnp.sqrt(fan_in)
        return jax.random.uniform(k, shape, jnp.float32, -bound, bound)

    params = {
        # base.linear1: Linear(10, 20)
        "w1": uniform(k1, (10, 20), 10),
        "b1": uniform(k2, (1, 20), 10),
        # base.linear2: Linear(20, 5)
        "w2": uniform(k3, (20, 5), 20),
        "b2": uniform(k4, (1, 5), 20),
        # output: Linear(5, 1)
        "w3": uniform(k5, (5, 1), 5),
        "b3": uniform(k6, (1, 1), 5),
    }
    # TODO(synk): base.conv (Conv2d(3, 6, 3)) exists as a parameter in the
    # PyTorch module but is never used in forward(), so it is intentionally
    # not instantiated / computed here.
    return params


def reference_forward(x, params):
    h1 = x @ params["w1"] + params["b1"]
    h2 = h1 @ params["w2"] + params["b2"]
    return h2 @ params["w3"] + params["b3"]


if __name__ == "__main__":
    key = jax.random.PRNGKey(0)
    pkey, xkey = jax.random.split(key)
    params = init_params(pkey)

    batch = 8
    x = jax.random.normal(xkey, (batch, 10), dtype=jnp.float32)

    out = model_with_nesting_forward(x, params)
    out = jax.block_until_ready(out)

    ref = reference_forward(x, params)
    assert out.shape == (batch, 1), out.shape
    assert jnp.allclose(out, ref, atol=1e-5, rtol=1e-5), (
        f"max abs err {jnp.max(jnp.abs(out - ref))}")

    print("KERNEL_OK")
</pallas_src>

<mosaic_0001>
module attributes {stable_mosaic.version = 11 : i64} {
  func.func @_collapsed_linear_kernel(%arg0: i32, %arg1: memref<8x10xf32, #tpu.memory_space<vmem>>, %arg2: memref<1x10xf32, #tpu.memory_space<vmem>>, %arg3: memref<1x1xf32, #tpu.memory_space<vmem>>, %arg4: memref<1x8xf32, #tpu.memory_space<vmem>>) attributes {dimension_semantics = [#tpu.dimension_semantics<parallel>], iteration_bounds = array<i64: 1>, scalar_prefetch = 0 : i64, scratch_operands = 0 : i64, tpu.core_type = #tpu.core_type<tc>, window_params = [{transform_indices = @transform_0, window_bounds = array<i64: 8, 10>}, {pipeline_mode = #tpu.pipeline_mode<synchronous>, transform_indices = @transform_1, window_bounds = array<i64: 1, 10>}, {pipeline_mode = #tpu.pipeline_mode<synchronous>, transform_indices = @transform_2, window_bounds = array<i64: 1, 1>}, {transform_indices = @transform_3, window_bounds = array<i64: 1, 8>}]} {
    %c0 = arith.constant 0 : index
    %c0_0 = arith.constant 0 : index
    %0 = vector.load %arg2[%c0, %c0_0] : memref<1x10xf32, #tpu.memory_space<vmem>>, vector<1x10xf32>
    %c0_1 = arith.constant 0 : index
    %c0_2 = arith.constant 0 : index
    %1 = vector.load %arg1[%c0_1, %c0_2] : memref<8x10xf32, #tpu.memory_space<vmem>>, vector<8x10xf32>
    %cst = arith.constant dense<0.000000e+00> : vector<1x8xf32>
    %2 = tpu.matmul %0, %1, %cst {dimension_numbers = #tpu.dot_dimension_numbers<[1], [1], [0], [0], [0, 0, 1, 0], [], []>} : vector<1x10xf32>, vector<8x10xf32>, vector<1x8xf32> -> vector<1x8xf32>
    %c0_3 = arith.constant 0 : index
    %c0_4 = arith.constant 0 : index
    %3 = vector.load %arg3[%c0_3, %c0_4] : memref<1x1xf32, #tpu.memory_space<vmem>>, vector<1x1xf32>
    %4 = vector.broadcast %3 : vector<1x1xf32> to vector<1x8xf32>
    %5 = arith.addf %2, %4 : vector<1x8xf32>
    %c0_5 = arith.constant 0 : index
    %c0_6 = arith.constant 0 : index
    %6 = vector.load %arg4[%c0_5, %c0_6] : memref<1x8xf32, #tpu.memory_space<vmem>>, vector<1x8xf32>
    tpu.vector_store %arg4[%c0_5, %c0_6], %5 {strides = array<i32>} : memref<1x8xf32, #tpu.memory_space<vmem>>, vector<1x8xf32>,
    return
  }
  func.func @transform_0(%arg0: i32) -> (i32, i32) {
    %c0_i32 = arith.constant 0 : i32
    %c0_i32_0 = arith.constant 0 : i32
    return %arg0, %c0_i32 : i32, i32
  }
  func.func @transform_1(%arg0: i32) -> (i32, i32) {
    %c0_i32 = arith.constant 0 : i32
    %c0_i32_0 = arith.constant 0 : i32
    %c0_i32_1 = arith.constant 0 : i32
    return %c0_i32, %c0_i32_0 : i32, i32
  }
  func.func @transform_2(%arg0: i32) -> (i32, i32) {
    %c0_i32 = arith.constant 0 : i32
    %c0_i32_0 = arith.constant 0 : i32
    %c0_i32_1 = arith.constant 0 : i32
    return %c0_i32, %c0_i32_0 : i32, i32
  }
  func.func @transform_3(%arg0: i32) -> (i32, i32) {
    %c0_i32 = arith.constant 0 : i32
    %c0_i32_0 = arith.constant 0 : i32
    return %c0_i32, %arg0 : i32, i32
  }
}

</mosaic_0001>

<llo_original>
// kernel: model_with_nesting_forward.1
$region0: #{model_with_nesting_forward.1}
  #allocation0 [shape = 'u32[]', space=smem, size = 0x4, offset = 0x4, fixed_abs, tag = 'smem constant byte address 0x4 - core index']
  #allocation1 [shape = 'u32[144,128]{1,0:T(1,128)}', space=vmem, size = 0x12000, scoped, tag = 'internal scratch']
  #allocation2 [shape = 'f32[1,1]{1,0:T(1,128)S(1)}', space=vmem, size = 0x200, scoped, tag = 'scoped memory for model_with_nesting_forward.1']
  %s0 = inlined_call_operand.vmem [shape: f32[8,10], index: 0, kind: input, shape index: {}]
  %s1 = inlined_call_operand.vmem [shape: f32[1,10], index: 1, kind: input, shape index: {}]
  %s2 = inlined_call_operand.<no memory space> [shape: f32[1,1], index: 2, kind: input, shape index: {}]
  %s3 = inlined_call_operand.hbm [shape: f32[1,8], index: 3, kind: output, shape index: {}]
  %s4 = sld [smem:[#allocation0]]
  $region22: #{model_with_nesting_forward.1} parent=0
    _
  %s6 = ssub.s32 1, %s4
  %s7 = scalar_select 0, %s6, %s4
  %v8 = vstv %s2
  %9 = vst [vmem:[#allocation2] sm:$0x1] %v8
  $region1: #{model_with_nesting_forward.1} parent=0
    #allocation3 [shape = 'u8[512]{0}', space=vmem, size = 0x400, scoped, tag = 'output window, operand 0, single buffered']
    #allocation4 [shape = 's32[1]{0}', space=sflag, size = 0x4, scoped, tag = 'scoped memory for model_with_nesting_forward.1']
    %10 = vsyncpa [#allocation4], 0
    // Predicated region
    $region2: #{model_with_nesting_forward.1} parent=1 // pred_check
      _
    $region3: #{model_with_nesting_forward.1} parent=1 // pred_check_branch
      %12 = sbr.rel (0) target = $region5
    $region4: #{model_with_nesting_forward.1} parent=1 // pred_region
      _
    $region5: #{model_with_nesting_forward.1} parent=1 // pred_fallthru
      _
    // Predicated region
    $region6: #{model_with_nesting_forward.1} parent=1 // pred_check
      _
    $region7: #{model_with_nesting_forward.1} parent=1 // pred_check_branch
      %14 = sbr.rel (0) target = $region9
    $region8: #{model_with_nesting_forward.1} parent=1 // pred_region
      _
    $region9: #{model_with_nesting_forward.1} parent=1 // pred_fallthru
      _
    // Predicated region
    $region10: #{model_with_nesting_forward.1} parent=1 // pred_check
      _
    $region11: #{model_with_nesting_forward.1} parent=1 // pred_check_branch
      %16 = sbr.rel (0) target = $region13
    $region12: #{model_with_nesting_forward.1} parent=1 // pred_region
      _
    $region13: #{model_with_nesting_forward.1} parent=1 // pred_fallthru
      _
    %v17 = vld [vmem:[%s1] sm:$0x1]
    %v18 = vld [vmem:[%s0] sm:$0xff]
    %v19 = vld [vmem:[#allocation2] sm:$0x1]
    %21 = vset.pattern.permute.xlu0 0
    %22 = vperm.xlu0 %21, %v19
    %v23 = vpop.permute.xlu0 %22
    %v25 = vlaneseq
    %v26 = vshrl.u32 %v25, 7
    %v27 = vsub.s32 0, %v26
    %v28 = vrot.slane %v23, %v27
    %vm29 = vcmask 80896
    %v31 = vsel %vm29, %v17, 0
    %v34 = vsel %vm29, %v18, 0
    %36 = vmatprep.subr.mxu0 0.0
    %37 = vmatpush1.xpose.msra.mxu0 %v34
    %38 = vmatprep.subr.mxu0 0.0
    %39 = vmatpush1.xpose.msra.mxu0 0.0
    %40 = vmatprep.subr.mxu0 0.0
    %41 = vmatpush1.xpose.msra.mxu0 0.0
    %42 = vmatprep.subr.mxu0 0.0
    %43 = vmatpush1.xpose.msra.mxu0 0.0
    %44 = vmatprep.subr.mxu0 0.0
    %45 = vmatpush1.xpose.msra.mxu0 0.0
    %46 = vmatprep.subr.mxu0 0.0
    %47 = vmatpush1.xpose.msra.mxu0 0.0
    %48 = vmatprep.subr.mxu0 0.0
    %49 = vmatpush1.xpose.msra.mxu0 0.0
    %50 = vmatprep.subr.mxu0 0.0
    %51 = vmatpush1.xpose.msra.mxu0 0.0
    %52 = vmatprep.subr.mxu0 0.0
    %53 = vmatpush1.xpose.msra.mxu0 0.0
    %54 = vmatprep.subr.mxu0 0.0
    %55 = vmatpush1.xpose.msra.mxu0 0.0
    %56 = vmatprep.subr.mxu0 0.0
    %57 = vmatpush1.xpose.msra.mxu0 0.0
    %58 = vmatprep.subr.mxu0 0.0
    %59 = vmatpush1.xpose.msra.mxu0 0.0
    %60 = vmatprep.subr.mxu0 0.0
    %61 = vmatpush1.xpose.msra.mxu0 0.0
    %62 = vmatprep.subr.mxu0 0.0
    %63 = vmatpush1.xpose.msra.mxu0 0.0
    %64 = vmatprep.subr.mxu0 0.0
    %65 = vmatpush1.xpose.msra.mxu0 0.0
    %66 = vmatprep.subr.mxu0 0.0
    %67 = vmatpush1.xpose.msra.mxu0 0.0
    %68 = vmatprep.subr.mxu0 0.0
    %69 = vmatpush1.xpose.msra.mxu0 0.0
    %70 = vmatprep.subr.mxu0 0.0
    %71 = vmatpush1.xpose.msra.mxu0 0.0
    %72 = vmatprep.subr.mxu0 0.0
    %73 = vmatpush1.xpose.msra.mxu0 0.0
    %74 = vmatprep.subr.mxu0 0.0
    %75 = vmatpush1.xpose.msra.mxu0 0.0
    %76 = vmatprep.subr.mxu0 0.0
    %77 = vmatpush1.xpose.msra.mxu0 0.0
    %78 = vmatprep.subr.mxu0 0.0
    %79 = vmatpush1.xpose.msra.mxu0 0.0
    %80 = vmatprep.subr.mxu0 0.0
    %81 = vmatpush1.xpose.msra.mxu0 0.0
    %82 = vmatprep.subr.mxu0 0.0
    %83 = vmatpush1.xpose.msra.mxu0 0.0
    %84 = vmatprep.subr.mxu0 0.0
    %85 = vmatpush1.xpose.msra.mxu0 0.0
    %86 = vmatprep.subr.mxu0 0.0
    %87 = vmatpush1.xpose.msra.mxu0 0.0
    %88 = vmatprep.subr.mxu0 0.0
    %89 = vmatpush1.xpose.msra.mxu0 0.0
    %90 = vmatprep.subr.mxu0 0.0
    %91 = vmatpush1.xpose.msra.mxu0 0.0
    %92 = vmatprep.subr.mxu0 0.0
    %93 = vmatpush1.xpose.msra.mxu0 0.0
    %94 = vmatprep.subr.mxu0 0.0
    %95 = vmatpush1.xpose.msra.mxu0 0.0
    %96 = vmatprep.subr.mxu0 0.0
    %97 = vmatpush1.xpose.msra.mxu0 0.0
    %98 = vmatprep.subr.mxu0 0.0
    %99 = vmatpush1.xpose.msra.mxu0 0.0
    %100 = vmatprep.mubr.f32.mxu0 0.0
    %101 = vmatmul.mubr.f32.gmra.mrb[0].mxu0 %v31
    %v102 = vpop.f32.mrb[0].mxu0
    %v103 = vadd.f32 %v28, %v102
    %v104 = vpop.f32.mrb[0].mxu0
    %105 = vdwg.mxu0
    %vm106 = vcmask 57344
    %107 = vst.msk [vmem:[#allocation3] sm:$0x1] %vm106, %v103
    // Predicated region
    $region14: #{model_with_nesting_forward.1} parent=1 // pred_check
      _
    $region15: #{model_with_nesting_forward.1} parent=1 // pred_check_branch
      %109 = sbr.rel (0) target = $region17
    $region16: #{model_with_nesting_forward.1} parent=1 // pred_region
      %s111 = ssub.s32 16, 16
      %112 = vsyncadd [#allocation4], %s111
      %s114 = sshll.u32 [#allocation3], 4
      %s115 = int_to_ptr.vmem [resolvable:$true] %s114
      %117 = dma.vmem_to_hbm [thread:$0]  %s115, 16, %s3, [#allocation4]
    $region17: #{model_with_nesting_forward.1} parent=1 // pred_fallthru
      _
    // Predicated region
    $region18: #{model_with_nesting_forward.1} parent=1 // pred_check
      _
    $region19: #{model_with_nesting_forward.1} parent=1 // pred_check_branch
      %119 = sbr.rel (0) target = $region21
    $region20: #{model_with_nesting_forward.1} parent=1 // pred_region
      %120 = dma.done [#allocation4], 16
    $region21: #{model_with_nesting_forward.1} parent=1 // pred_fallthru
      _
    %121 = vsyncpa [#allocation4], 1

</llo_original>
